<compile_context>
chip_gen: v6e
topology: v6e:2x2x1
jax: 0.10.0
libtpu: 0.0.40
codegen_flags: <defaults>
</compile_context>

<pallas_src>
import math

import jax
import jax.numpy as jnp
from jax.experimental import pallas as pl
from jax.experimental.pallas import tpu as pltpu


def _round_up(x: int, m: int) -> int:
    return ((x + m - 1) // m) * m


def _fourier_kernel(x_ref, bt_ref, out_ref):
    # x_ref  : (tile_n, d_input)             VMEM, f32
    # bt_ref : (d_input, n_feats)            VMEM, f32 (already scaled by 2*pi)
    # out_ref: (tile_n, d_input + 2*n_feats) VMEM, out dtype
    x = x_ref[...].astype(jnp.float32)
    bt = bt_ref[...].astype(jnp.float32)
    d_input = x.shape[-1]

    if d_input <= 8:
        # Tiny contraction: unrolled broadcast multiply-adds on the VPU instead of a
        # K=4-ish MXU matmul; overlaps with the EUP cos/sin work.
        bx = x[:, 0:1] * bt[0:1, :]
        for k in range(1, d_input):
            bx = bx + x[:, k : k + 1] * bt[k : k + 1, :]
    else:
        bx = jnp.dot(x, bt, preferred_element_type=jnp.float32)

    # Single fused output row [x | cos(2*pi*Bx) | sin(2*pi*Bx)]; one full-block store.
    out_ref[...] = jnp.concatenate(
        [x, jnp.cos(bx), jnp.sin(bx)], axis=-1
    ).astype(out_ref.dtype)


def fourier_encode(
    x: jax.Array,
    B: jax.Array,
    *,
    tile_n: int = 1024,
    out_dtype=None,
) -> jax.Array:
    """Pallas implementation of FourierEncoder.forward.

    x : [N, d_input] float32
    B : [n_feats, d_input] float32 (random Fourier matrix)
    returns [N, d_input + 2*n_feats] in `out_dtype` (defaults to x.dtype).
    """
    N, d_input = x.shape
    n_feats, d_b = B.shape
    assert d_b == d_input, "B must be (n_feats, d_input)"
    out_dtype = jnp.dtype(out_dtype) if out_dtype is not None else x.dtype
    d_out = d_input + 2 * n_feats

    # Fold the 2*pi factor into the (tiny) Fourier matrix once, outside the kernel,
    # and transpose so the kernel computes x @ (2*pi*B)^T directly.
    bt = (2.0 * math.pi) * B.T.astype(jnp.float32)  # (d_input, n_feats)

    # Effective row tile: multiple of 8, no larger than (padded) N.
    tile = min(_round_up(max(tile_n, 8), 8), _round_up(max(N, 1), 8))
    n_pad = _round_up(max(N, 1), tile)
    x_p = x if n_pad == N else jnp.pad(x, ((0, n_pad - N), (0, 0)))

    grid = (n_pad // tile,)
    out = pl.pallas_call(
        _fourier_kernel,
        out_shape=jax.ShapeDtypeStruct((n_pad, d_out), out_dtype),
        grid_spec=pltpu.PrefetchScalarGridSpec(
            num_scalar_prefetch=0,
            grid=grid,
            in_specs=[
                # Row tile of x; last dim equals full d_input (allowed).
                pl.BlockSpec((tile, d_input), lambda i: (i, 0)),
                # Full (scaled) B^T every step; tiny, stays resident in VMEM.
                pl.BlockSpec((d_input, n_feats), lambda i: (0, 0)),
            ],
            out_specs=pl.BlockSpec((tile, d_out), lambda i: (i, 0)),
        ),
        compiler_params=pltpu.CompilerParams(
            dimension_semantics=("parallel",),
        ),
    )(x_p, bt)

    return out if n_pad == N else out[:N]


def fourier_encode_ref(x: jax.Array, B: jax.Array) -> jax.Array:
    """Pure-JAX reference matching the PyTorch forward."""
    bx = x @ B.T
    return jnp.concatenate(
        [x, jnp.cos(2.0 * math.pi * bx), jnp.sin(2.0 * math.pi * bx)], axis=-1
    )


if __name__ == "__main__":
    k1, k2, k3, k4 = jax.random.split(jax.random.PRNGKey(0), 4)
    sigma = 1.0

    # Config 1: typical module use (3D point + time, 16 frequencies).
    # N=19 deliberately not a multiple of 8 to exercise the pad-and-slice path and the
    # unrolled-VPU contraction (d_input <= 8).
    d_input, n_feats, N = 4, 16, 19
    x1 = jax.random.normal(k1, (N, d_input), dtype=jnp.float32)
    B1 = sigma * jax.random.normal(k2, (n_feats, d_input), dtype=jnp.float32)
    out1 = jax.block_until_ready(fourier_encode(x1, B1))
    ref1 = fourier_encode_ref(x1, B1)
    assert out1.shape == (N, d_input + 2 * n_feats)
    assert jnp.allclose(out1, ref1, atol=2e-5, rtol=1e-5), "config 1 mismatch"

    # Config 2: wider d_input exercises the MXU-dot path.
    d_input, n_feats, N = 16, 32, 64
    x2 = jax.random.normal(k3, (N, d_input), dtype=jnp.float32)
    B2 = sigma * jax.random.normal(k4, (n_feats, d_input), dtype=jnp.float32)
    out2 = jax.block_until_ready(fourier_encode(x2, B2))
    ref2 = fourier_encode_ref(x2, B2)
    assert out2.shape == (N, d_input + 2 * n_feats)
    assert jnp.allclose(out2, ref2, atol=2e-5, rtol=1e-5), "config 2 mismatch"

    # Config 3: bf16 output (the write-bandwidth saving recommended for v6e/v7x).
    out3 = jax.block_until_ready(fourier_encode(x1, B1, out_dtype=jnp.bfloat16))
    assert out3.dtype == jnp.bfloat16
    assert jnp.allclose(
        out3.astype(jnp.float32), ref1, atol=2e-2, rtol=2e-2
    ), "bf16 output mismatch"

    print("KERNEL_OK")
</pallas_src>

<mosaic_0001>
module attributes {stable_mosaic.version = 11 : i64} {
  func.func @_fourier_kernel(%arg0: i32, %arg1: memref<24x4xf32, #tpu.memory_space<vmem>>, %arg2: memref<4x16xf32, #tpu.memory_space<vmem>>, %arg3: memref<24x36xf32, #tpu.memory_space<vmem>>) attributes {dimension_semantics = [#tpu.dimension_semantics<parallel>], iteration_bounds = array<i64: 1>, scalar_prefetch = 0 : i64, scratch_operands = 0 : i64, tpu.core_type = #tpu.core_type<tc>, window_params = [{transform_indices = @transform_0, window_bounds = array<i64: 24, 4>}, {pipeline_mode = #tpu.pipeline_mode<synchronous>, transform_indices = @transform_1, window_bounds = array<i64: 4, 16>}, {transform_indices = @transform_2, window_bounds = array<i64: 24, 36>}]} {
    %c0 = arith.constant 0 : index
    %c0_0 = arith.constant 0 : index
    %0 = vector.load %arg1[%c0, %c0_0] : memref<24x4xf32, #tpu.memory_space<vmem>>, vector<24x4xf32>
    %c0_1 = arith.constant 0 : index
    %c0_2 = arith.constant 0 : index
    %1 = vector.load %arg2[%c0_1, %c0_2] : memref<4x16xf32, #tpu.memory_space<vmem>>, vector<4x16xf32>
    %2 = vector.extract_strided_slice %0 {offsets = [0, 0], sizes = [24, 1], strides = [1, 1]} : vector<24x4xf32> to vector<24x1xf32>
    %3 = vector.extract_strided_slice %1 {offsets = [0, 0], sizes = [1, 16], strides = [1, 1]} : vector<4x16xf32> to vector<1x16xf32>
    %4 = vector.broadcast %2 : vector<24x1xf32> to vector<24x16xf32>
    %5 = vector.broadcast %3 : vector<1x16xf32> to vector<24x16xf32>
    %6 = arith.mulf %4, %5 : vector<24x16xf32>
    %7 = vector.extract_strided_slice %0 {offsets = [0, 1], sizes = [24, 1], strides = [1, 1]} : vector<24x4xf32> to vector<24x1xf32>
    %8 = vector.extract_strided_slice %1 {offsets = [1, 0], sizes = [1, 16], strides = [1, 1]} : vector<4x16xf32> to vector<1x16xf32>
    %9 = vector.broadcast %7 : vector<24x1xf32> to vector<24x16xf32>
    %10 = vector.broadcast %8 : vector<1x16xf32> to vector<24x16xf32>
    %11 = arith.mulf %9, %10 : vector<24x16xf32>
    %12 = arith.addf %6, %11 : vector<24x16xf32>
    %13 = vector.extract_strided_slice %0 {offsets = [0, 2], sizes = [24, 1], strides = [1, 1]} : vector<24x4xf32> to vector<24x1xf32>
    %14 = vector.extract_strided_slice %1 {offsets = [2, 0], sizes = [1, 16], strides = [1, 1]} : vector<4x16xf32> to vector<1x16xf32>
    %15 = vector.broadcast %13 : vector<24x1xf32> to vector<24x16xf32>
    %16 = vector.broadcast %14 : vector<1x16xf32> to vector<24x16xf32>
    %17 = arith.mulf %15, %16 : vector<24x16xf32>
    %18 = arith.addf %12, %17 : vector<24x16xf32>
    %19 = vector.extract_strided_slice %0 {offsets = [0, 3], sizes = [24, 1], strides = [1, 1]} : vector<24x4xf32> to vector<24x1xf32>
    %20 = vector.extract_strided_slice %1 {offsets = [3, 0], sizes = [1, 16], strides = [1, 1]} : vector<4x16xf32> to vector<1x16xf32>
    %21 = vector.broadcast %19 : vector<24x1xf32> to vector<24x16xf32>
    %22 = vector.broadcast %20 : vector<1x16xf32> to vector<24x16xf32>
    %23 = arith.mulf %21, %22 : vector<24x16xf32>
    %24 = arith.addf %18, %23 : vector<24x16xf32>
    %25 = math.cos %24 : vector<24x16xf32>
    %26 = math.sin %24 : vector<24x16xf32>
    %27 = tpu.concatenate %0, %25, %26 in 1 : vector<24x4xf32>, vector<24x16xf32>, vector<24x16xf32> -> vector<24x36xf32>
    %c0_3 = arith.constant 0 : index
    %c0_4 = arith.constant 0 : index
    %28 = vector.load %arg3[%c0_3, %c0_4] : memref<24x36xf32, #tpu.memory_space<vmem>>, vector<24x36xf32>
    tpu.vector_store %arg3[%c0_3, %c0_4], %27 {strides = array<i32>} : memref<24x36xf32, #tpu.memory_space<vmem>>, vector<24x36xf32>,
    return
  }
  func.func @transform_0(%arg0: i32) -> (i32, i32) {
    %c0_i32 = arith.constant 0 : i32
    %c0_i32_0 = arith.constant 0 : i32
    return %arg0, %c0_i32 : i32, i32
  }
  func.func @transform_1(%arg0: i32) -> (i32, i32) {
    %c0_i32 = arith.constant 0 : i32
    %c0_i32_0 = arith.constant 0 : i32
    %c0_i32_1 = arith.constant 0 : i32
    return %c0_i32, %c0_i32_0 : i32, i32
  }
  func.func @transform_2(%arg0: i32) -> (i32, i32) {
    %c0_i32 = arith.constant 0 : i32
    %c0_i32_0 = arith.constant 0 : i32
    return %arg0, %c0_i32 : i32, i32
  }
}

</mosaic_0001>

<llo_original>
// kernel: tpu_custom_call.1
$region0: #{tpu_custom_call.1}
  #allocation0 [shape = 'u32[]', space=smem, size = 0x4, offset = 0x4, fixed_abs, tag = 'smem constant byte address 0x4 - core index']
  #allocation1 [shape = 'u32[144,128]{1,0:T(1,128)}', space=vmem, size = 0x12000, scoped, tag = 'internal scratch']
  %s0 = inlined_call_operand.vmem [shape: f32[24,4], index: 0, kind: input, shape index: {}]
  %s1 = inlined_call_operand.vmem [shape: f32[4,16], index: 1, kind: input, shape index: {}]
  %s2 = inlined_call_operand.hbm [shape: f32[24,36], index: 2, kind: output, shape index: {}]
  %s3 = sld [smem:[#allocation0]]
  $region18: #{tpu_custom_call.1} parent=0
    _
  %s5 = ssub.s32 1, %s3
  %s6 = scalar_select 0, %s5, %s3
  $region1: #{tpu_custom_call.1} parent=0
    #allocation2 [shape = 'u8[12288]{0}', space=vmem, size = 0x3000, scoped, tag = 'output window, operand 0, single buffered']
    #allocation3 [shape = 's32[1]{0}', space=sflag, size = 0x4, scoped, tag = 'scoped memory for tpu_custom_call.1']
    %7 = vsyncpa [#allocation3], 0
    // Predicated region
    $region2: #{tpu_custom_call.1} parent=1 // pred_check
      _
    $region3: #{tpu_custom_call.1} parent=1 // pred_check_branch
      %9 = sbr.rel (0) target = $region5
    $region4: #{tpu_custom_call.1} parent=1 // pred_region
      _
    $region5: #{tpu_custom_call.1} parent=1 // pred_fallthru
      _
    // Predicated region
    $region6: #{tpu_custom_call.1} parent=1 // pred_check
      _
    $region7: #{tpu_custom_call.1} parent=1 // pred_check_branch
      %11 = sbr.rel (0) target = $region9
    $region8: #{tpu_custom_call.1} parent=1 // pred_region
      _
    $region9: #{tpu_custom_call.1} parent=1 // pred_fallthru
      _
    %v12 = vld [vmem:[%s0] sm:$0xff]
    %v13 = vld [vmem:[%s0 + $0x8] sm:$0xff]
    %v14 = vld [vmem:[%s0 + $0x10] sm:$0xff]
    %v15 = vld [vmem:[%s1] sm:$0xf]
    %17 = vset.pattern.permute.xlu0 0
    %18 = vperm.xlu0 %17, %v12
    %v19 = vpop.permute.xlu0 %18
    %22 = vset.pattern.permute.xlu0 0
    %23 = vperm.xlu0 %22, %v13
    %v24 = vpop.permute.xlu0 %23
    %27 = vset.pattern.permute.xlu0 0
    %28 = vperm.xlu0 %27, %v14
    %v29 = vpop.permute.xlu0 %28
    %v31 = vlaneseq
    %v32 = vshrl.u32 %v31, 7
    %v33 = vsub.s32 0, %v32
    %v34 = vrot.slane %v15, %v33
    %v35 = vmul.f32 %v19, %v34
    %v36 = vmul.f32 %v24, %v34
    %v37 = vmul.f32 %v29, %v34
    %38 = vset.pattern.permute.xlu0 1
    %39 = vperm.xlu0 %38, %v12
    %v40 = vpop.permute.xlu0 %39
    %42 = vset.pattern.permute.xlu0 1
    %43 = vperm.xlu0 %42, %v13
    %v44 = vpop.permute.xlu0 %43
    %46 = vset.pattern.permute.xlu0 1
    %47 = vperm.xlu0 %46, %v14
    %v48 = vpop.permute.xlu0 %47
    %v50 = vlaneseq
    %v51 = vshrl.u32 %v50, 7
    %v52 = vsub.s32 1, %v51
    %v53 = vrot.slane %v15, %v52
    %v54 = vmul.f32 %v40, %v53
    %v55 = vmul.f32 %v44, %v53
    %v56 = vmul.f32 %v48, %v53
    %v57 = vadd.f32 %v35, %v54
    %v58 = vadd.f32 %v36, %v55
    %v59 = vadd.f32 %v37, %v56
    %60 = vset.pattern.permute.xlu0 2
    %61 = vperm.xlu0 %60, %v12
    %v62 = vpop.permute.xlu0 %61
    %64 = vset.pattern.permute.xlu0 2
    %65 = vperm.xlu0 %64, %v13
    %v66 = vpop.permute.xlu0 %65
    %68 = vset.pattern.permute.xlu0 2
    %69 = vperm.xlu0 %68, %v14
    %v70 = vpop.permute.xlu0 %69
    %v72 = vlaneseq
    %v73 = vshrl.u32 %v72, 7
    %v74 = vsub.s32 2, %v73
    %v75 = vrot.slane %v15, %v74
    %v76 = vmul.f32 %v62, %v75
    %v77 = vmul.f32 %v66, %v75
    %v78 = vmul.f32 %v70, %v75
    %v79 = vadd.f32 %v57, %v76
    %v80 = vadd.f32 %v58, %v77
    %v81 = vadd.f32 %v59, %v78
    %82 = vset.pattern.permute.xlu0 3
    %83 = vperm.xlu0 %82, %v12
    %v84 = vpop.permute.xlu0 %83
    %86 = vset.pattern.permute.xlu0 3
    %87 = vperm.xlu0 %86, %v13
    %v88 = vpop.permute.xlu0 %87
    %90 = vset.pattern.permute.xlu0 3
    %91 = vperm.xlu0 %90, %v14
    %v92 = vpop.permute.xlu0 %91
    %v94 = vlaneseq
    %v95 = vshrl.u32 %v94, 7
    %v96 = vsub.s32 3, %v95
    %v97 = vrot.slane %v15, %v96
    %v98 = vmul.f32 %v84, %v97
    %v99 = vmul.f32 %v88, %v97
    %v100 = vmul.f32 %v92, %v97
    %v101 = vadd.f32 %v79, %v98
    %v102 = vadd.f32 %v80, %v99
    %v103 = vadd.f32 %v81, %v100
    %v104 = vand.u32 2147483647, %v101
    %vm105 = vcmp.le.f32.partialorder %v104, 0.7853982
    %vm106 = vcmp.lt.s32.totalorder %v101, 0
    %v107 = vand.u32 %v101, 2139095040
    %v108 = vshrl.u32 %v107, 23
    %v109 = vsub.s32 %v108, 127
    %v110 = vand.u32 2147483647, %v101
    %v111 = vand.u32 %v110, 8388607
    %v112 = vor.u32 %v111, 8388608
    %v113 = vsub.s32 0, %v112
    %v114 = vadd.s32 %v109, 1
    %vm115 = vcmp.gt.s32.totalorder %v114, 0
    %v116 = vsel %vm115, %v114, 0
    %v117 = vshrl.u32 %v116, 5
    %v118 = vand.u32 %v116, 31
    %v119 = vsub.s32 32, %v118
    %v120 = vshrl.u32 683565275, %v119
    %v121 = vshll.u32 683565275, %v118
    %v122 = vshrl.u32 2475754826, %v119
    %v123 = vor.u32 %v121, %v122
    %v124 = vshll.u32 2475754826, %v118
    %v125 = vshrl.u32 2131351028, %v119
    %v126 = vor.u32 %v124, %v125
    %v127 = vshll.u32 2131351028, %v118
    %v128 = vshrl.u32 2102212464, %v119
    %v129 = vor.u32 %v127, %v128
    %v130 = vshll.u32 2102212464, %v118
    %v131 = vshrl.u32 920167782, %v119
    %v132 = vor.u32 %v130, %v131
    %v133 = vshll.u32 920167782, %v118
    %v134 = vshrl.u32 1326507024, %v119
    %v135 = vor.u32 %v133, %v134
    %vm136 = vcmp.lt.s32.totalorder %v117, 1
    %vm137 = vcmp.lt.s32.totalorder %v117, 2
    %vm138 = vcmp.lt.s32.totalorder %v117, 3
    %vm139 = vcmp.lt.s32.totalorder %v117, 4
    %v140 = vsel %vm136, %v120, %v123
    %v141 = vsel %vm139, %v129, 2102212464
    %v142 = vsel %vm138, %v126, %v141
    %v143 = vsel %vm137, %v140, %v142
    %v144 = vsel %vm136, %v123, %v126
    %v145 = vsel %vm139, %v132, 920167782
    %v146 = vsel %vm138, %v129, %v145
    %v147 = vsel %vm137, %v144, %v146
    %v148 = vsel %vm136, %v126, %v129
    %v149 = vsel %vm139, %v135, 1326507024
    %v150 = vsel %vm138, %v132, %v149
    %v151 = vsel %vm137, %v148, %v150
    %v152 = vshll.u32 %v112, 8
    %v153 = vmul.u32.u64.compose %v152, %v151
    %v154 = vextract.low.u32 %v153
    %v155 = vextract.high.u32 %v153
    %v156 = vmul.u32.u64.compose %v152, %v147
    %v157 = vextract.low.u32 %v156
    %v158 = vextract.high.u32 %v156
    %v159 = vmul.u32 %v152, %v143
    %v160 = vadd.s32 %v155, %v157
    %vm161 = vc.u32 %v155, %v157
    %v162 = vadd.s32 %v158, 1
    %v163 = vsel %vm161, %v162, %v158
    %v164 = vadd.s32 %v159, %v163
    %v165 = vadd.s32 %v164, 536870912
    %v166 = vshrl.u32 %v165, 30
    %v167 = vshll.u32 %v166, 30
    %v168 = vsub.s32 %v164, %v167
    %vm169 = vcmp.lt.s32.totalorder %v168, 0
    %v170 = vsub.s32 0, %v168
    %v171 = vsel %vm169, %v170, %v168
    %v172 = vclz %v171
    %v173 = vsub.s32 %v172, 2
    %vm174 = vcmp.gt.s32.totalorder 0, %v173
    %v175 = vsel %vm174, 0, %v173
    %v176 = vsub.s32 32, %v175
    %v177 = vshll.u32 %v168, %v175
    %v178 = vshrl.u32 %v160, %v176
    %v179 = vor.u32 %v177, %v178
    %v180 = vsub.s32 4294967266, %v175
    %v181 = vadd.s32 %v180, 127
    %v182 = vshll.u32 %v181, 23
    %v183 = vor.u32 4788187, %v182
    %v184 = vand.u32 2147483647, %v183
    %v186 = vcvt.s32.f32 %v179
    %v187 = vmul.f32 %v186, %v184
    %v188 = vxor.u32 %v187, 2147483648
    %v189 = vsel %vm106, %v188, %v187
    %v190 = vsub.s32 4, %v166
    %v191 = vsel %vm106, %v190, %v166
    %v192 = vsel %vm105, %v101, %v189
    %v193 = vsel %vm105, 0, %v191
    %v194 = vcosq.f32.pop %v192
    %v195 = vsinq.f32.pop %v192
    %vm196 = vweird.f32 %v101
    %v197 = vand.u32 %v193, 3
    %vm198 = vcmp.lt.s32.totalorder %v197, 2
    %vm199 = vcmp.eq.s32.totalorder %v197, 0
    %v200 = vxor.u32 %v195, 2147483648
    %v201 = vsel %vm199, %v194, %v200
    %vm202 = vcmp.eq.s32.totalorder %v197, 2
    %v203 = vxor.u32 %v194, 2147483648
    %v204 = vsel %vm202, %v203, %v195
    %v205 = vsel %vm198, %v201, %v204
    %v206 = vsel %vm196, nan, %v205
    %v207 = vand.u32 2147483647, %v102
    %vm208 = vcmp.le.f32.partialorder %v207, 0.7853982
    %vm209 = vcmp.lt.s32.totalorder %v102, 0
    %v210 = vand.u32 %v102, 2139095040
    %v211 = vshrl.u32 %v210, 23
    %v212 = vsub.s32 %v211, 127
    %v213 = vand.u32 2147483647, %v102
    %v214 = vand.u32 %v213, 8388607
    %v215 = vor.u32 %v214, 8388608
    %v216 = vsub.s32 0, %v215
    %v217 = vadd.s32 %v212, 1
    %vm218 = vcmp.gt.s32.totalorder %v217, 0
    %v219 = vsel %vm218, %v217, 0
    %v220 = vshrl.u32 %v219, 5
    %v221 = vand.u32 %v219, 31
    %v222 = vsub.s32 32, %v221
    %v223 = vshrl.u32 683565275, %v222
    %v224 = vshll.u32 683565275, %v221
    %v225 = vshrl.u32 2475754826, %v222
    %v226 = vor.u32 %v224, %v225
    %v227 = vshll.u32 2475754826, %v221
    %v228 = vshrl.u32 2131351028, %v222
    %v229 = vor.u32 %v227, %v228
    %v230 = vshll.u32 2131351028, %v221
    %v231 = vshrl.u32 2102212464, %v222
    %v232 = vor.u32 %v230, %v231
    %v233 = vshll.u32 2102212464, %v221
    %v234 = vshrl.u32 920167782, %v222
    %v235 = vor.u32 %v233, %v234
    %v236 = vshll.u32 920167782, %v221
    %v237 = vshrl.u32 1326507024, %v222
    %v238 = vor.u32 %v236, %v237
    %vm239 = vcmp.lt.s32.totalorder %v220, 1
    %vm240 = vcmp.lt.s32.totalorder %v220, 2
    %vm241 = vcmp.lt.s32.totalorder %v220, 3
    %vm242 = vcmp.lt.s32.totalorder %v220, 4
    %v243 = vsel %vm239, %v223, %v226
    %v244 = vsel %vm242, %v232, 2102212464
    %v245 = vsel %vm241, %v229, %v244
    %v246 = vsel %vm240, %v243, %v245
    %v247 = vsel %vm239, %v226, %v229
    %v248 = vsel %vm242, %v235, 920167782
    %v249 = vsel %vm241, %v232, %v248
    %v250 = vsel %vm240, %v247, %v249
    %v251 = vsel %vm239, %v229, %v232
    %v252 = vsel %vm242, %v238, 1326507024
    %v253 = vsel %vm241, %v235, %v252
    %v254 = vsel %vm240, %v251, %v253
    %v255 = vshll.u32 %v215, 8
    %v256 = vmul.u32.u64.compose %v255, %v254
    %v257 = vextract.low.u32 %v256
    %v258 = vextract.high.u32 %v256
    %v259 = vmul.u32.u64.compose %v255, %v250
    %v260 = vextract.low.u32 %v259
    %v261 = vextract.high.u32 %v259
    %v262 = vmul.u32 %v255, %v246
    %v263 = vadd.s32 %v258, %v260
    %vm264 = vc.u32 %v258, %v260
    %v265 = vadd.s32 %v261, 1
    %v266 = vsel %vm264, %v265, %v261
    %v267 = vadd.s32 %v262, %v266
    %v268 = vadd.s32 %v267, 536870912
    %v269 = vshrl.u32 %v268, 30
    %v270 = vshll.u32 %v269, 30
    %v271 = vsub.s32 %v267, %v270
    %vm272 = vcmp.lt.s32.totalorder %v271, 0
    %v273 = vsub.s32 0, %v271
    %v274 = vsel %vm272, %v273, %v271
    %v275 = vclz %v274
    %v276 = vsub.s32 %v275, 2
    %vm277 = vcmp.gt.s32.totalorder 0, %v276
    %v278 = vsel %vm277, 0, %v276
    %v279 = vsub.s32 32, %v278
    %v280 = vshll.u32 %v271, %v278
    %v281 = vshrl.u32 %v263, %v279
    %v282 = vor.u32 %v280, %v281
    %v283 = vsub.s32 4294967266, %v278
    %v284 = vadd.s32 %v283, 127
    %v285 = vshll.u32 %v284, 23
    %v286 = vor.u32 4788187, %v285
    %v287 = vand.u32 2147483647, %v286
    %v289 = vcvt.s32.f32 %v282
    %v290 = vmul.f32 %v289, %v287
    %v291 = vxor.u32 %v290, 2147483648
    %v292 = vsel %vm209, %v291, %v290
    %v293 = vsub.s32 4, %v269
    %v294 = vsel %vm209, %v293, %v269
    %v295 = vsel %vm208, %v102, %v292
    %v296 = vsel %vm208, 0, %v294
    %v297 = vcosq.f32.pop %v295
    %v298 = vsinq.f32.pop %v295
    %vm299 = vweird.f32 %v102
    %v300 = vand.u32 %v296, 3
    %vm301 = vcmp.lt.s32.totalorder %v300, 2
    %vm302 = vcmp.eq.s32.totalorder %v300, 0
    %v303 = vxor.u32 %v298, 2147483648
    %v304 = vsel %vm302, %v297, %v303
    %vm305 = vcmp.eq.s32.totalorder %v300, 2
    %v306 = vxor.u32 %v297, 2147483648
    %v307 = vsel %vm305, %v306, %v298
    %v308 = vsel %vm301, %v304, %v307
    %v309 = vsel %vm299, nan, %v308
    %v310 = vand.u32 2147483647, %v103
    %vm311 = vcmp.le.f32.partialorder %v310, 0.7853982
    %vm312 = vcmp.lt.s32.totalorder %v103, 0
    %v313 = vand.u32 %v103, 2139095040
    %v314 = vshrl.u32 %v313, 23
    %v315 = vsub.s32 %v314, 127
    %v316 = vand.u32 2147483647, %v103
    %v317 = vand.u32 %v316, 8388607
    %v318 = vor.u32 %v317, 8388608
    %v319 = vsub.s32 0, %v318
    %v320 = vadd.s32 %v315, 1
    %vm321 = vcmp.gt.s32.totalorder %v320, 0
    %v322 = vsel %vm321, %v320, 0
    %v323 = vshrl.u32 %v322, 5
    %v324 = vand.u32 %v322, 31
    %v325 = vsub.s32 32, %v324
    %v326 = vshrl.u32 683565275, %v325
    %v327 = vshll.u32 683565275, %v324
    %v328 = vshrl.u32 2475754826, %v325
    %v329 = vor.u32 %v327, %v328
    %v330 = vshll.u32 2475754826, %v324
    %v331 = vshrl.u32 2131351028, %v325
    %v332 = vor.u32 %v330, %v331
    %v333 = vshll.u32 2131351028, %v324
    %v334 = vshrl.u32 2102212464, %v325
    %v335 = vor.u32 %v333, %v334
    %v336 = vshll.u32 2102212464, %v324
    %v337 = vshrl.u32 920167782, %v325
    %v338 = vor.u32 %v336, %v337
    %v339 = vshll.u32 920167782, %v324
    %v340 = vshrl.u32 1326507024, %v325
    %v341 = vor.u32 %v339, %v340
    %vm342 = vcmp.lt.s32.totalorder %v323, 1
    %vm343 = vcmp.lt.s32.totalorder %v323, 2
    %vm344 = vcmp.lt.s32.totalorder %v323, 3
    %vm345 = vcmp.lt.s32.totalorder %v323, 4
    %v346 = vsel %vm342, %v326, %v329
    %v347 = vsel %vm345, %v335, 2102212464
    %v348 = vsel %vm344, %v332, %v347
    %v349 = vsel %vm343, %v346, %v348
    %v350 = vsel %vm342, %v329, %v332
    %v351 = vsel %vm345, %v338, 920167782
    %v352 = vsel %vm344, %v335, %v351
    %v353 = vsel %vm343, %v350, %v352
    %v354 = vsel %vm342, %v332, %v335
    %v355 = vsel %vm345, %v341, 1326507024
    %v356 = vsel %vm344, %v338, %v355
    %v357 = vsel %vm343, %v354, %v356
    %v358 = vshll.u32 %v318, 8
    %v359 = vmul.u32.u64.compose %v358, %v357
    %v360 = vextract.low.u32 %v359
    %v361 = vextract.high.u32 %v359
    %v362 = vmul.u32.u64.compose %v358, %v353
    %v363 = vextract.low.u32 %v362
    %v364 = vextract.high.u32 %v362
    %v365 = vmul.u32 %v358, %v349
    %v366 = vadd.s32 %v361, %v363
    %vm367 = vc.u32 %v361, %v363
    %v368 = vadd.s32 %v364, 1
    %v369 = vsel %vm367, %v368, %v364
    %v370 = vadd.s32 %v365, %v369
    %v371 = vadd.s32 %v370, 536870912
    %v372 = vshrl.u32 %v371, 30
    %v373 = vshll.u32 %v372, 30
    %v374 = vsub.s32 %v370, %v373
    %vm375 = vcmp.lt.s32.totalorder %v374, 0
    %v376 = vsub.s32 0, %v374
    %v377 = vsel %vm375, %v376, %v374
    %v378 = vclz %v377
    %v379 = vsub.s32 %v378, 2
    %vm380 = vcmp.gt.s32.totalorder 0, %v379
    %v381 = vsel %vm380, 0, %v379
    %v382 = vsub.s32 32, %v381
    %v383 = vshll.u32 %v374, %v381
    %v384 = vshrl.u32 %v366, %v382
    %v385 = vor.u32 %v383, %v384
    %v386 = vsub.s32 4294967266, %v381
    %v387 = vadd.s32 %v386, 127
    %v388 = vshll.u32 %v387, 23
    %v389 = vor.u32 4788187, %v388
    %v390 = vand.u32 2147483647, %v389
    %v392 = vcvt.s32.f32 %v385
    %v393 = vmul.f32 %v392, %v390
    %v394 = vxor.u32 %v393, 2147483648
    %v395 = vsel %vm312, %v394, %v393
    %v396 = vsub.s32 4, %v372
    %v397 = vsel %vm312, %v396, %v372
    %v398 = vsel %vm311, %v103, %v395
    %v399 = vsel %vm311, 0, %v397
    %v400 = vcosq.f32.pop %v398
    %v401 = vsinq.f32.pop %v398
    %vm402 = vweird.f32 %v103
    %v403 = vand.u32 %v399, 3
    %vm404 = vcmp.lt.s32.totalorder %v403, 2
    %vm405 = vcmp.eq.s32.totalorder %v403, 0
    %v406 = vxor.u32 %v401, 2147483648
    %v407 = vsel %vm405, %v400, %v406
    %vm408 = vcmp.eq.s32.totalorder %v403, 2
    %v409 = vxor.u32 %v400, 2147483648
    %v410 = vsel %vm408, %v409, %v401
    %v411 = vsel %vm404, %v407, %v410
    %v412 = vsel %vm402, nan, %v411
    %v413 = vand.u32 2147483647, %v101
    %vm414 = vcmp.le.f32.partialorder %v413, 0.7853982
    %vm415 = vcmp.lt.s32.totalorder %v101, 0
    %v416 = vand.u32 %v101, 2139095040
    %v417 = vshrl.u32 %v416, 23
    %v418 = vsub.s32 %v417, 127
    %v419 = vand.u32 2147483647, %v101
    %v420 = vand.u32 %v419, 8388607
    %v421 = vor.u32 %v420, 8388608
    %v422 = vsub.s32 0, %v421
    %v423 = vadd.s32 %v418, 1
    %vm424 = vcmp.gt.s32.totalorder %v423, 0
    %v425 = vsel %vm424, %v423, 0
    %v426 = vshrl.u32 %v425, 5
    %v427 = vand.u32 %v425, 31
    %v428 = vsub.s32 32, %v427
    %v429 = vshrl.u32 683565275, %v428
    %v430 = vshll.u32 683565275, %v427
    %v431 = vshrl.u32 2475754826, %v428
    %v432 = vor.u32 %v430, %v431
    %v433 = vshll.u32 2475754826, %v427
    %v434 = vshrl.u32 2131351028, %v428
    %v435 = vor.u32 %v433, %v434
    %v436 = vshll.u32 2131351028, %v427
    %v437 = vshrl.u32 2102212464, %v428
    %v438 = vor.u32 %v436, %v437
    %v439 = vshll.u32 2102212464, %v427
    %v440 = vshrl.u32 920167782, %v428
    %v441 = vor.u32 %v439, %v440
    %v442 = vshll.u32 920167782, %v427
    %v443 = vshrl.u32 1326507024, %v428
    %v444 = vor.u32 %v442, %v443
    %vm445 = vcmp.lt.s32.totalorder %v426, 1
    %vm446 = vcmp.lt.s32.totalorder %v426, 2
    %vm447 = vcmp.lt.s32.totalorder %v426, 3
    %vm448 = vcmp.lt.s32.totalorder %v426, 4
    %v449 = vsel %vm445, %v429, %v432
    %v450 = vsel %vm448, %v438, 2102212464
    %v451 = vsel %vm447, %v435, %v450
    %v452 = vsel %vm446, %v449, %v451
    %v453 = vsel %vm445, %v432, %v435
    %v454 = vsel %vm448, %v441, 920167782
    %v455 = vsel %vm447, %v438, %v454
    %v456 = vsel %vm446, %v453, %v455
    %v457 = vsel %vm445, %v435, %v438
    %v458 = vsel %vm448, %v444, 1326507024
    %v459 = vsel %vm447, %v441, %v458
    %v460 = vsel %vm446, %v457, %v459
    %v461 = vshll.u32 %v421, 8
    %v462 = vmul.u32.u64.compose %v461, %v460
    %v463 = vextract.low.u32 %v462
    %v464 = vextract.high.u32 %v462
    %v465 = vmul.u32.u64.compose %v461, %v456
    %v466 = vextract.low.u32 %v465
    %v467 = vextract.high.u32 %v465
    %v468 = vmul.u32 %v461, %v452
    %v469 = vadd.s32 %v464, %v466
    %vm470 = vc.u32 %v464, %v466
    %v471 = vadd.s32 %v467, 1
    %v472 = vsel %vm470, %v471, %v467
    %v473 = vadd.s32 %v468, %v472
    %v474 = vadd.s32 %v473, 536870912
    %v475 = vshrl.u32 %v474, 30
    %v476 = vshll.u32 %v475, 30
    %v477 = vsub.s32 %v473, %v476
    %vm478 = vcmp.lt.s32.totalorder %v477, 0
    %v479 = vsub.s32 0, %v477
    %v480 = vsel %vm478, %v479, %v477
    %v481 = vclz %v480
    %v482 = vsub.s32 %v481, 2
    %vm483 = vcmp.gt.s32.totalorder 0, %v482
    %v484 = vsel %vm483, 0, %v482
    %v485 = vsub.s32 32, %v484
    %v486 = vshll.u32 %v477, %v484
    %v487 = vshrl.u32 %v469, %v485
    %v488 = vor.u32 %v486, %v487
    %v489 = vsub.s32 4294967266, %v484
    %v490 = vadd.s32 %v489, 127
    %v491 = vshll.u32 %v490, 23
    %v492 = vor.u32 4788187, %v491
    %v493 = vand.u32 2147483647, %v492
    %v495 = vcvt.s32.f32 %v488
    %v496 = vmul.f32 %v495, %v493
    %v497 = vxor.u32 %v496, 2147483648
    %v498 = vsel %vm415, %v497, %v496
    %v499 = vsub.s32 4, %v475
    %v500 = vsel %vm415, %v499, %v475
    %v501 = vsel %vm414, %v101, %v498
    %v502 = vsel %vm414, 0, %v500
    %v503 = vcosq.f32.pop %v501
    %v504 = vsinq.f32.pop %v501
    %vm505 = vweird.f32 %v101
    %v506 = vadd.s32 %v502, 3
    %v507 = vand.u32 %v506, 3
    %vm508 = vcmp.lt.s32.totalorder %v507, 2
    %vm509 = vcmp.eq.s32.totalorder %v507, 0
    %v510 = vxor.u32 %v504, 2147483648
    %v511 = vsel %vm509, %v503, %v510
    %vm512 = vcmp.eq.s32.totalorder %v507, 2
    %v513 = vxor.u32 %v503, 2147483648
    %v514 = vsel %vm512, %v513, %v504
    %v515 = vsel %vm508, %v511, %v514
    %v516 = vsel %vm505, nan, %v515
    %v517 = vand.u32 2147483647, %v102
    %vm518 = vcmp.le.f32.partialorder %v517, 0.7853982
    %vm519 = vcmp.lt.s32.totalorder %v102, 0
    %v520 = vand.u32 %v102, 2139095040
    %v521 = vshrl.u32 %v520, 23
    %v522 = vsub.s32 %v521, 127
    %v523 = vand.u32 2147483647, %v102
    %v524 = vand.u32 %v523, 8388607
    %v525 = vor.u32 %v524, 8388608
    %v526 = vsub.s32 0, %v525
    %v527 = vadd.s32 %v522, 1
    %vm528 = vcmp.gt.s32.totalorder %v527, 0
    %v529 = vsel %vm528, %v527, 0
    %v530 = vshrl.u32 %v529, 5
    %v531 = vand.u32 %v529, 31
    %v532 = vsub.s32 32, %v531
    %v533 = vshrl.u32 683565275, %v532
    %v534 = vshll.u32 683565275, %v531
    %v535 = vshrl.u32 2475754826, %v532
    %v536 = vor.u32 %v534, %v535
    %v537 = vshll.u32 2475754826, %v531
    %v538 = vshrl.u32 2131351028, %v532
    %v539 = vor.u32 %v537, %v538
    %v540 = vshll.u32 2131351028, %v531
    %v541 = vshrl.u32 2102212464, %v532
    %v542 = vor.u32 %v540, %v541
    %v543 = vshll.u32 2102212464, %v531
    %v544 = vshrl.u32 920167782, %v532
    %v545 = vor.u32 %v543, %v544
    %v546 = vshll.u32 920167782, %v531
    %v547 = vshrl.u32 1326507024, %v532
    %v548 = vor.u32 %v546, %v547
    %vm549 = vcmp.lt.s32.totalorder %v530, 1
    %vm550 = vcmp.lt.s32.totalorder %v530, 2
    %vm551 = vcmp.lt.s32.totalorder %v530, 3
    %vm552 = vcmp.lt.s32.totalorder %v530, 4
    %v553 = vsel %vm549, %v533, %v536
    %v554 = vsel %vm552, %v542, 2102212464
    %v555 = vsel %vm551, %v539, %v554
    %v556 = vsel %vm550, %v553, %v555
    %v557 = vsel %vm549, %v536, %v539
    %v558 = vsel %vm552, %v545, 920167782
    %v559 = vsel %vm551, %v542, %v558
    %v560 = vsel %vm550, %v557, %v559
    %v561 = vsel %vm549, %v539, %v542
    %v562 = vsel %vm552, %v548, 1326507024
    %v563 = vsel %vm551, %v545, %v562
    %v564 = vsel %vm550, %v561, %v563
    %v565 = vshll.u32 %v525, 8
    %v566 = vmul.u32.u64.compose %v565, %v564
    %v567 = vextract.low.u32 %v566
    %v568 = vextract.high.u32 %v566
    %v569 = vmul.u32.u64.compose %v565, %v560
    %v570 = vextract.low.u32 %v569
    %v571 = vextract.high.u32 %v569
    %v572 = vmul.u32 %v565, %v556
    %v573 = vadd.s32 %v568, %v570
    %vm574 = vc.u32 %v568, %v570
    %v575 = vadd.s32 %v571, 1
    %v576 = vsel %vm574, %v575, %v571
    %v577 = vadd.s32 %v572, %v576
    %v578 = vadd.s32 %v577, 536870912
    %v579 = vshrl.u32 %v578, 30
    %v580 = vshll.u32 %v579, 30
    %v581 = vsub.s32 %v577, %v580
    %vm582 = vcmp.lt.s32.totalorder %v581, 0
    %v583 = vsub.s32 0, %v581
    %v584 = vsel %vm582, %v583, %v581
    %v585 = vclz %v584
    %v586 = vsub.s32 %v585, 2
    %vm587 = vcmp.gt.s32.totalorder 0, %v586
    %v588 = vsel %vm587, 0, %v586
    %v589 = vsub.s32 32, %v588
    %v590 = vshll.u32 %v581, %v588
    %v591 = vshrl.u32 %v573, %v589
    %v592 = vor.u32 %v590, %v591
    %v593 = vsub.s32 4294967266, %v588
    %v594 = vadd.s32 %v593, 127
    %v595 = vshll.u32 %v594, 23
    %v596 = vor.u32 4788187, %v595
    %v597 = vand.u32 2147483647, %v596
    %v599 = vcvt.s32.f32 %v592
    %v600 = vmul.f32 %v599, %v597
    %v601 = vxor.u32 %v600, 2147483648
    %v602 = vsel %vm519, %v601, %v600
    %v603 = vsub.s32 4, %v579
    %v604 = vsel %vm519, %v603, %v579
    %v605 = vsel %vm518, %v102, %v602
    %v606 = vsel %vm518, 0, %v604
    %v607 = vcosq.f32.pop %v605
    %v608 = vsinq.f32.pop %v605
    %vm609 = vweird.f32 %v102
    %v610 = vadd.s32 %v606, 3
    %v611 = vand.u32 %v610, 3
    %vm612 = vcmp.lt.s32.totalorder %v611, 2
    %vm613 = vcmp.eq.s32.totalorder %v611, 0
    %v614 = vxor.u32 %v608, 2147483648
    %v615 = vsel %vm613, %v607, %v614
    %vm616 = vcmp.eq.s32.totalorder %v611, 2
    %v617 = vxor.u32 %v607, 2147483648
    %v618 = vsel %vm616, %v617, %v608
    %v619 = vsel %vm612, %v615, %v618
    %v620 = vsel %vm609, nan, %v619
    %v621 = vand.u32 2147483647, %v103
    %vm622 = vcmp.le.f32.partialorder %v621, 0.7853982
    %vm623 = vcmp.lt.s32.totalorder %v103, 0
    %v624 = vand.u32 %v103, 2139095040
    %v625 = vshrl.u32 %v624, 23
    %v626 = vsub.s32 %v625, 127
    %v627 = vand.u32 2147483647, %v103
    %v628 = vand.u32 %v627, 8388607
    %v629 = vor.u32 %v628, 8388608
    %v630 = vsub.s32 0, %v629
    %v631 = vadd.s32 %v626, 1
    %vm632 = vcmp.gt.s32.totalorder %v631, 0
    %v633 = vsel %vm632, %v631, 0
    %v634 = vshrl.u32 %v633, 5
    %v635 = vand.u32 %v633, 31
    %v636 = vsub.s32 32, %v635
    %v637 = vshrl.u32 683565275, %v636
    %v638 = vshll.u32 683565275, %v635
    %v639 = vshrl.u32 2475754826, %v636
    %v640 = vor.u32 %v638, %v639
    %v641 = vshll.u32 2475754826, %v635
    %v642 = vshrl.u32 2131351028, %v636
    %v643 = vor.u32 %v641, %v642
    %v644 = vshll.u32 2131351028, %v635
    %v645 = vshrl.u32 2102212464, %v636
    %v646 = vor.u32 %v644, %v645
    %v647 = vshll.u32 2102212464, %v635
    %v648 = vshrl.u32 920167782, %v636
    %v649 = vor.u32 %v647, %v648
    %v650 = vshll.u32 920167782, %v635
    %v651 = vshrl.u32 1326507024, %v636
    %v652 = vor.u32 %v650, %v651
    %vm653 = vcmp.lt.s32.totalorder %v634, 1
    %vm654 = vcmp.lt.s32.totalorder %v634, 2
    %vm655 = vcmp.lt.s32.totalorder %v634, 3
    %vm656 = vcmp.lt.s32.totalorder %v634, 4
    %v657 = vsel %vm653, %v637, %v640
    %v658 = vsel %vm656, %v646, 2102212464
    %v659 = vsel %vm655, %v643, %v658
    %v660 = vsel %vm654, %v657, %v659
    %v661 = vsel %vm653, %v640, %v643
    %v662 = vsel %vm656, %v649, 920167782
    %v663 = vsel %vm655, %v646, %v662
    %v664 = vsel %vm654, %v661, %v663
    %v665 = vsel %vm653, %v643, %v646
    %v666 = vsel %vm656, %v652, 1326507024
    %v667 = vsel %vm655, %v649, %v666
    %v668 = vsel %vm654, %v665, %v667
    %v669 = vshll.u32 %v629, 8
    %v670 = vmul.u32.u64.compose %v669, %v668
    %v671 = vextract.low.u32 %v670
    %v672 = vextract.high.u32 %v670
    %v673 = vmul.u32.u64.compose %v669, %v664
    %v674 = vextract.low.u32 %v673
    %v675 = vextract.high.u32 %v673
    %v676 = vmul.u32 %v669, %v660
    %v677 = vadd.s32 %v672, %v674
    %vm678 = vc.u32 %v672, %v674
    %v679 = vadd.s32 %v675, 1
    %v680 = vsel %vm678, %v679, %v675
    %v681 = vadd.s32 %v676, %v680
    %v682 = vadd.s32 %v681, 536870912
    %v683 = vshrl.u32 %v682, 30
    %v684 = vshll.u32 %v683, 30
    %v685 = vsub.s32 %v681, %v684
    %vm686 = vcmp.lt.s32.totalorder %v685, 0
    %v687 = vsub.s32 0, %v685
    %v688 = vsel %vm686, %v687, %v685
    %v689 = vclz %v688
    %v690 = vsub.s32 %v689, 2
    %vm691 = vcmp.gt.s32.totalorder 0, %v690
    %v692 = vsel %vm691, 0, %v690
    %v693 = vsub.s32 32, %v692
    %v694 = vshll.u32 %v685, %v692
    %v695 = vshrl.u32 %v677, %v693
    %v696 = vor.u32 %v694, %v695
    %v697 = vsub.s32 4294967266, %v692
    %v698 = vadd.s32 %v697, 127
    %v699 = vshll.u32 %v698, 23
    %v700 = vor.u32 4788187, %v699
    %v701 = vand.u32 2147483647, %v700
    %v703 = vcvt.s32.f32 %v696
    %v704 = vmul.f32 %v703, %v701
    %v705 = vxor.u32 %v704, 2147483648
    %v706 = vsel %vm623, %v705, %v704
    %v707 = vsub.s32 4, %v683
    %v708 = vsel %vm623, %v707, %v683
    %v709 = vsel %vm622, %v103, %v706
    %v710 = vsel %vm622, 0, %v708
    %v711 = vcosq.f32.pop %v709
    %v712 = vsinq.f32.pop %v709
    %vm713 = vweird.f32 %v103
    %v714 = vadd.s32 %v710, 3
    %v715 = vand.u32 %v714, 3
    %vm716 = vcmp.lt.s32.totalorder %v715, 2
    %vm717 = vcmp.eq.s32.totalorder %v715, 0
    %v718 = vxor.u32 %v712, 2147483648
    %v719 = vsel %vm717, %v711, %v718
    %vm720 = vcmp.eq.s32.totalorder %v715, 2
    %v721 = vxor.u32 %v711, 2147483648
    %v722 = vsel %vm720, %v721, %v712
    %v723 = vsel %vm716, %v719, %v722
    %v724 = vsel %vm713, nan, %v723
    %728 = vrot.lane.b32.xlu0 %v206, 4
    %v729 = vpop.permute.xlu0 %728
    %730 = vrot.lane.b32.xlu0 %v309, 4
    %v731 = vpop.permute.xlu0 %730
    %732 = vrot.lane.b32.xlu0 %v412, 4
    %v733 = vpop.permute.xlu0 %732
    %740 = vrot.lane.b32.xlu0 %v516, 20
    %v741 = vpop.permute.xlu0 %740
    %742 = vrot.lane.b32.xlu0 %v620, 20
    %v743 = vpop.permute.xlu0 %742
    %744 = vrot.lane.b32.xlu0 %v724, 20
    %v745 = vpop.permute.xlu0 %744
    %vm749 = vcmask 31744
    %v750 = vsel %vm749, %v12, %v729
    %v751 = vsel %vm749, %v13, %v731
    %v752 = vsel %vm749, %v14, %v733
    %vm753 = vcmask 162816
    %v754 = vsel %vm753, %v750, %v741
    %v755 = vsel %vm753, %v751, %v743
    %v756 = vsel %vm753, %v752, %v745
    %vm757 = vcmask 293888
    %758 = vst.msk [vmem:[#allocation2] sm:$0xff] %vm757, %v754
    %759 = vst.msk [vmem:[#allocation2 + $0x8] sm:$0xff] %vm757, %v755
    %760 = vst.msk [vmem:[#allocation2 + $0x10] sm:$0xff] %vm757, %v756
    // Predicated region
    $region10: #{tpu_custom_call.1} parent=1 // pred_check
      _
    $region11: #{tpu_custom_call.1} parent=1 // pred_check_branch
      %762 = sbr.rel (0) target = $region13
    $region12: #{tpu_custom_call.1} parent=1 // pred_region
      %s764 = ssub.s32 384, 384
      %765 = vsyncadd [#allocation3], %s764
      %s766 = sshll.u32 [#allocation2], 4
      %s767 = int_to_ptr.vmem [resolvable:$true] %s766
      %772 = dma.vmem_to_hbm [thread:$0]  %s767, 384, %s2, [#allocation3], 128, 128, 8
    $region13: #{tpu_custom_call.1} parent=1 // pred_fallthru
      _
    // Predicated region
    $region14: #{tpu_custom_call.1} parent=1 // pred_check
      _
    $region15: #{tpu_custom_call.1} parent=1 // pred_check_branch
      %774 = sbr.rel (0) target = $region17
    $region16: #{tpu_custom_call.1} parent=1 // pred_region
      %775 = dma.done [#allocation3], 384
    $region17: #{tpu_custom_call.1} parent=1 // pred_fallthru
      _
    %776 = vsyncpa [#allocation3], 1

</llo_original>
